<compile_context>
chip_gen: v5e
topology: v5e:2x2
jax: 0.10.0
libtpu: 0.0.40
codegen_flags: <defaults>
</compile_context>

<pallas_src>
import functools

import jax
import jax.numpy as jnp
from jax.experimental import pallas as pl
from jax.experimental.pallas import tpu as pltpu


def _focal_loss_kernel(loc_p_ref, loc_t_ref, cls_p_ref, cls_t_ref,
                       out_ref,
                       loc_acc, cls_acc, npos_acc,
                       *, n_rows, tile_n, steps_per_chunk, alpha, gamma):
    c = pl.program_id(0)          # chunk index (parallel)
    i = pl.program_id(1)          # lane-tile step within chunk (arbitrary)

    @pl.when(i == 0)
    def _init():
        loc_acc[...] = jnp.zeros_like(loc_acc)
        cls_acc[...] = jnp.zeros_like(cls_acc)
        npos_acc[...] = jnp.zeros_like(npos_acc)

    # Unclamped global column offset of this tile; out-of-range lanes (ragged
    # last tile / clamped duplicate tile) are masked out below.
    off = (c * steps_per_chunk + i) * tile_n
    lane = jax.lax.broadcasted_iota(jnp.int32, (1, tile_n), 1) + off
    in_range = lane < n_rows                         # (1, tile_n)

    y = cls_t_ref[...]                               # (1, tile_n) int32
    valid = in_range & (y > -1)                      # rows used for cls loss
    pos = in_range & (y > 0)                         # foreground rows

    # ---- SmoothL1 (beta=1), masked by pos, reduced over the 4 coords ----
    lp = loc_p_ref[...].astype(jnp.float32)          # (4, tile_n)
    lt = loc_t_ref[...].astype(jnp.float32)
    d = jnp.abs(lp - lt)
    sl1 = jnp.where(d < 1.0, 0.5 * d * d, d - 0.5)
    sl1 = jnp.where(pos, sl1, 0.0)                   # select (not mul): NaN-safe
    loc_acc[...] += jnp.sum(sl1, axis=0, keepdims=True)

    # ---- Focal loss, masked by valid, reduced over the C classes ----
    x = cls_p_ref[...].astype(jnp.float32)           # (C, tile_n)
    x = jnp.where(valid, x, 0.0)                     # sanitize padded lanes
    cls_row = jax.lax.broadcasted_iota(jnp.int32, x.shape, 0)
    is_t = (cls_row + 1) == y                        # one_hot(y, 1+C)[:, 1:].T (bool)
    # p_t = sigmoid(z) with z = +x for the target class, -x otherwise.
    # Reduced-EUP formulation: one exp, one log, one divide per element.
    z = jnp.where(is_t, x, -x)
    e = jnp.exp(-jnp.abs(z))                         # e in (0, 1]
    # ce = BCE-with-logits = -log(p_t) = softplus(-z).  With e <= 1 the
    # log(1+e) vs log1p(e) difference is < 1e-7 absolute, irrelevant here.
    ce = jnp.maximum(-z, 0.0) + jnp.log(1.0 + e)
    one_minus_pt = jnp.where(z >= 0.0, e, 1.0) / (1.0 + e)   # = sigmoid(-z)
    g = float(gamma)
    if g == 2.0:
        mod = one_minus_pt * one_minus_pt
    elif g == 1.0:
        mod = one_minus_pt
    elif g == 0.0:
        mod = jnp.ones_like(one_minus_pt)
    else:
        # clamp to avoid log(0) when p_t saturates to 1
        mod = jnp.exp(g * jnp.log(jnp.maximum(one_minus_pt, 1e-20)))
    loss = ce * mod
    if alpha >= 0:
        a = float(alpha)
        loss = jnp.where(is_t, a, 1.0 - a) * loss
    loss = jnp.where(valid, loss, 0.0)
    cls_acc[...] += jnp.sum(loss, axis=0, keepdims=True)

    # ---- num_pos ----
    npos_acc[...] += pos.astype(jnp.float32)

    # One cross-lane reduction + one lane-dense 128-wide store per chunk.
    @pl.when(i == pl.num_programs(1) - 1)
    def _finalize():
        loc_s = jnp.sum(loc_acc[...])
        cls_s = jnp.sum(cls_acc[...])
        npos_s = jnp.sum(npos_acc[...])
        lane128 = jax.lax.broadcasted_iota(jnp.int32, (1, 128), 1)
        out_ref[0] = (jnp.where(lane128 == 0, loc_s, 0.0)
                      + jnp.where(lane128 == 1, cls_s, 0.0)
                      + jnp.where(lane128 == 2, npos_s, 0.0))


def focal_loss_forward(loc_preds, loc_targets, cls_preds, cls_targets,
                       *, num_classes, alpha, gamma,
                       tile_n=8192, num_chunks=2):
    B, A, _ = loc_preds.shape
    C = cls_preds.shape[-1]
    assert C == num_classes
    N = B * A

    # Lane-dense layout: N on the 128-lane axis (inputs stay in native dtype).
    lp = jnp.transpose(loc_preds.reshape(N, 4))        # (4, N)
    lt = jnp.transpose(loc_targets.reshape(N, 4))      # (4, N)
    cp = jnp.transpose(cls_preds.reshape(N, C))        # (C, N)
    ct = cls_targets.reshape(1, N).astype(jnp.int32)   # (1, N)

    loc_isz = jnp.dtype(loc_preds.dtype).itemsize
    cls_isz = jnp.dtype(cls_preds.dtype).itemsize

    # Lane-tile cap from a VMEM budget: double-buffered inputs + accumulators.
    per_lane_bytes = 2 * (8 * loc_isz + C * cls_isz + 4) + 3 * 4
    budget = 24 * 2 ** 20
    cap = max(128, (budget // per_lane_bytes) // 128 * 128)

    # Lane tile: multiple of 128 (or the full extent for tiny N).
    if N >= 128:
        tile_n = max(128, min(tile_n, cap, (N // 128) * 128))
        tile_n = (tile_n // 128) * 128
    else:
        tile_n = N
    n_tiles = pl.cdiv(N, tile_n)
    num_chunks = max(1, min(num_chunks, n_tiles))      # outer parallel axis (v7x)
    steps = pl.cdiv(n_tiles, num_chunks)

    per_tile_in = tile_n * (8 * loc_isz + C * cls_isz + 4)
    scratch_bytes = 3 * tile_n * 4
    vmem_limit = int(min(64 * 2 ** 20,
                         max(16 * 2 ** 20,
                             2 * per_tile_in + scratch_bytes + (2 << 20))))

    def in_map(c, i):
        # Clamp so the block index stays in range; the in-kernel iota mask
        # zeroes any contribution from the clamped/ragged region.
        return (0, jnp.minimum(c * steps + i, n_tiles - 1))

    kernel = functools.partial(
        _focal_loss_kernel, n_rows=N, tile_n=tile_n, steps_per_chunk=steps,
        alpha=float(alpha), gamma=float(gamma))

    partials = pl.pallas_call(
        kernel,
        out_shape=jax.ShapeDtypeStruct((num_chunks, 1, 128), jnp.float32),
        grid_spec=pltpu.PrefetchScalarGridSpec(
            num_scalar_prefetch=0,
            grid=(num_chunks, steps),
            in_specs=[
                pl.BlockSpec((4, tile_n), in_map),
                pl.BlockSpec((4, tile_n), in_map),
                pl.BlockSpec((C, tile_n), in_map),
                pl.BlockSpec((1, tile_n), in_map),
            ],
            out_specs=pl.BlockSpec((1, 1, 128), lambda c, i: (c, 0, 0)),
            scratch_shapes=[
                pltpu.VMEM((1, tile_n), jnp.float32),   # loc partial sums
                pltpu.VMEM((1, tile_n), jnp.float32),   # cls partial sums
                pltpu.VMEM((1, tile_n), jnp.float32),   # num_pos partial sums
            ]),
        compiler_params=pltpu.CompilerParams(
            dimension_semantics=("parallel", "arbitrary"),
            vmem_limit_bytes=vmem_limit),
    )(lp, lt, cp, ct)

    loc_loss = jnp.sum(partials[:, 0, 0])
    cls_loss = jnp.sum(partials[:, 0, 1])
    num_pos = jnp.sum(partials[:, 0, 2])
    return jnp.where(num_pos == 0, cls_loss,
                     loc_loss / num_pos + cls_loss / num_pos)


def _reference_forward(loc_preds, loc_targets, cls_preds, cls_targets,
                       *, num_classes, alpha, gamma):
    """Pure-JAX mirror of the PyTorch module (mask-as-multiply formulation)."""
    pos = (cls_targets > 0)
    num_pos = jnp.sum(pos.astype(jnp.float32))
    d = jnp.abs(loc_preds - loc_targets)
    sl1 = jnp.where(d < 1.0, 0.5 * d * d, d - 0.5)
    loc_loss = jnp.sum(sl1 * pos[..., None].astype(jnp.float32))

    valid = (cls_targets > -1).astype(jnp.float32)
    t = jax.nn.one_hot(cls_targets, 1 + num_classes)[..., 1:]
    x = cls_preds
    p = jax.nn.sigmoid(x)
    ce = jnp.maximum(x, 0.0) - x * t + jnp.log1p(jnp.exp(-jnp.abs(x)))
    p_t = p * t + (1 - p) * (1 - t)
    loss = ce * (1 - p_t) ** gamma
    if alpha >= 0:
        loss = (alpha * t + (1 - alpha) * (1 - t)) * loss
    cls_loss = jnp.sum(loss * valid[..., None])
    return jnp.where(num_pos == 0, cls_loss,
                     loc_loss / num_pos + cls_loss / num_pos)


if __name__ == "__main__":
    num_classes = 4
    alpha = 0.25
    gamma = 2.0

    def make(B, A, key):
        k1, k2, k3, k4 = jax.random.split(key, 4)
        loc_preds = jax.random.normal(k1, (B, A, 4), dtype=jnp.float32)
        loc_targets = jax.random.normal(k2, (B, A, 4), dtype=jnp.float32)
        cls_preds = jax.random.normal(k3, (B, A, num_classes), dtype=jnp.float32)
        # labels in {-1 (ignore), 0 (background), 1..num_classes (foreground)}
        cls_targets = jax.random.randint(k4, (B, A), -1, num_classes + 1).astype(jnp.int32)
        return loc_preds, loc_targets, cls_preds, cls_targets

    # Small deterministic example (single full tile).
    args_small = make(2, 16, jax.random.PRNGKey(0))
    out = focal_loss_forward(*args_small, num_classes=num_classes,
                             alpha=alpha, gamma=gamma)
    out = jax.block_until_ready(out)
    ref = _reference_forward(*args_small, num_classes=num_classes,
                             alpha=alpha, gamma=gamma)
    assert jnp.allclose(out, ref, rtol=1e-4, atol=1e-4), (out, ref)

    # Medium example: exercises the multi-chunk parallel axis and the ragged
    # last lane-tile path.
    args_med = make(2, 5000, jax.random.PRNGKey(1))
    out_m = focal_loss_forward(*args_med, num_classes=num_classes,
                               alpha=alpha, gamma=gamma)
    out_m = jax.block_until_ready(out_m)
    ref_m = _reference_forward(*args_med, num_classes=num_classes,
                               alpha=alpha, gamma=gamma)
    assert jnp.allclose(out_m, ref_m, rtol=1e-4, atol=1e-4), (out_m, ref_m)

    print("KERNEL_OK")
</pallas_src>

<mosaic_0001>
module attributes {stable_mosaic.version = 11 : i64} {
  func.func @_focal_loss_kernel(%arg0: i32, %arg1: i32, %arg2: memref<4x32xf32, #tpu.memory_space<vmem>>, %arg3: memref<4x32xf32, #tpu.memory_space<vmem>>, %arg4: memref<4x32xf32, #tpu.memory_space<vmem>>, %arg5: memref<1x32xi32, #tpu.memory_space<vmem>>, %arg6: memref<1x1x128xf32, #tpu.memory_space<vmem>>, %arg7: memref<1x32xf32, #tpu.memory_space<vmem>>, %arg8: memref<1x32xf32, #tpu.memory_space<vmem>>, %arg9: memref<1x32xf32, #tpu.memory_space<vmem>>) attributes {dimension_semantics = [#tpu.dimension_semantics<parallel>, #tpu.dimension_semantics<arbitrary>], iteration_bounds = array<i64: 1, 1>, scalar_prefetch = 0 : i64, scratch_operands = 3 : i64, tpu.core_type = #tpu.core_type<tc>, window_params = [{transform_indices = @transform_0, window_bounds = array<i64: 4, 32>}, {transform_indices = @transform_1, window_bounds = array<i64: 4, 32>}, {transform_indices = @transform_2, window_bounds = array<i64: 4, 32>}, {transform_indices = @transform_3, window_bounds = array<i64: 1, 32>}, {transform_indices = @transform_4, window_bounds = array<i64: 1, 1, 128>}]} {
    %c0_i32 = arith.constant 0 : i32
    %0 = arith.cmpi eq, %arg1, %c0_i32 : i32
    %1 = arith.extui %0 : i1 to i32
    %c0_i32_0 = arith.constant 0 : i32
    %2 = arith.cmpi ne, %1, %c0_i32_0 : i32
    scf.if %2 {
      %cst_42 = arith.constant 0.000000e+00 : f32
      %94 = vector.broadcast %cst_42 : f32 to vector<1x32xf32>
      %c0_43 = arith.constant 0 : index
      %c0_44 = arith.constant 0 : index
      %95 = vector.load %arg7[%c0_43, %c0_44] : memref<1x32xf32, #tpu.memory_space<vmem>>, vector<1x32xf32>
      tpu.vector_store %arg7[%c0_43, %c0_44], %94 {strides = array<i32>} : memref<1x32xf32, #tpu.memory_space<vmem>>, vector<1x32xf32>,
      %cst_45 = arith.constant 0.000000e+00 : f32
      %96 = vector.broadcast %cst_45 : f32 to vector<1x32xf32>
      %c0_46 = arith.constant 0 : index
      %c0_47 = arith.constant 0 : index
      %97 = vector.load %arg8[%c0_46, %c0_47] : memref<1x32xf32, #tpu.memory_space<vmem>>, vector<1x32xf32>
      tpu.vector_store %arg8[%c0_46, %c0_47], %96 {strides = array<i32>} : memref<1x32xf32, #tpu.memory_space<vmem>>, vector<1x32xf32>,
      %cst_48 = arith.constant 0.000000e+00 : f32
      %98 = vector.broadcast %cst_48 : f32 to vector<1x32xf32>
      %c0_49 = arith.constant 0 : index
      %c0_50 = arith.constant 0 : index
      %99 = vector.load %arg9[%c0_49, %c0_50] : memref<1x32xf32, #tpu.memory_space<vmem>>, vector<1x32xf32>
      tpu.vector_store %arg9[%c0_49, %c0_50], %98 {strides = array<i32>} : memref<1x32xf32, #tpu.memory_space<vmem>>, vector<1x32xf32>,
    } else {
    }
    %c1_i32 = arith.constant 1 : i32
    %3 = arith.muli %arg0, %c1_i32 : i32
    %4 = arith.addi %3, %arg1 : i32
    %c32_i32 = arith.constant 32 : i32
    %5 = arith.muli %4, %c32_i32 : i32
    %6 = tpu.iota {dimensions = array<i32: 1>} : vector<1x32xi32>
    %7 = vector.broadcast %5 : i32 to vector<1x32xi32>
    %8 = arith.addi %6, %7 : vector<1x32xi32>
    %c32_i32_1 = arith.constant 32 : i32
    %9 = vector.broadcast %c32_i32_1 : i32 to vector<1x32xi32>
    %10 = arith.cmpi slt, %8, %9 : vector<1x32xi32>
    %c0 = arith.constant 0 : index
    %c0_2 = arith.constant 0 : index
    %11 = vector.load %arg5[%c0, %c0_2] : memref<1x32xi32, #tpu.memory_space<vmem>>, vector<1x32xi32>
    %c-1_i32 = arith.constant -1 : i32
    %12 = vector.broadcast %c-1_i32 : i32 to vector<1x32xi32>
    %13 = arith.cmpi sgt, %11, %12 : vector<1x32xi32>
    %14 = arith.andi %10, %13 : vector<1x32xi1>
    %c0_i32_3 = arith.constant 0 : i32
    %15 = vector.broadcast %c0_i32_3 : i32 to vector<1x32xi32>
    %16 = arith.cmpi sgt, %11, %15 : vector<1x32xi32>
    %17 = arith.andi %10, %16 : vector<1x32xi1>
    %c0_4 = arith.constant 0 : index
    %c0_5 = arith.constant 0 : index
    %18 = vector.load %arg2[%c0_4, %c0_5] : memref<4x32xf32, #tpu.memory_space<vmem>>, vector<4x32xf32>
    %c0_6 = arith.constant 0 : index
    %c0_7 = arith.constant 0 : index
    %19 = vector.load %arg3[%c0_6, %c0_7] : memref<4x32xf32, #tpu.memory_space<vmem>>, vector<4x32xf32>
    %20 = arith.subf %18, %19 : vector<4x32xf32>
    %21 = math.absf %20 : vector<4x32xf32>
    %cst = arith.constant 1.000000e+00 : f32
    %22 = vector.broadcast %cst : f32 to vector<4x32xf32>
    %23 = arith.cmpf olt, %21, %22 : vector<4x32xf32>
    %cst_8 = arith.constant 5.000000e-01 : f32
    %24 = vector.broadcast %cst_8 : f32 to vector<4x32xf32>
    %25 = arith.mulf %24, %21 : vector<4x32xf32>
    %26 = arith.mulf %25, %21 : vector<4x32xf32>
    %cst_9 = arith.constant 5.000000e-01 : f32
    %27 = vector.broadcast %cst_9 : f32 to vector<4x32xf32>
    %28 = arith.subf %21, %27 : vector<4x32xf32>
    %29 = arith.select %23, %26, %28 : vector<4x32xi1>, vector<4x32xf32>
    %cst_10 = arith.constant 0.000000e+00 : f32
    %30 = vector.shape_cast %17 : vector<1x32xi1> to vector<1x32xi1>
    %31 = vector.broadcast %30 : vector<1x32xi1> to vector<4x32xi1>
    %32 = vector.broadcast %cst_10 : f32 to vector<4x32xf32>
    %33 = arith.select %31, %29, %32 : vector<4x32xi1>, vector<4x32xf32>
    %c0_11 = arith.constant 0 : index
    %c0_12 = arith.constant 0 : index
    %34 = vector.load %arg7[%c0_11, %c0_12] : memref<1x32xf32, #tpu.memory_space<vmem>>, vector<1x32xf32>
    %cst_13 = arith.constant dense<0.000000e+00> : vector<32xf32>
    %35 = vector.multi_reduction <add>, %33, %cst_13 [0] : vector<4x32xf32> to vector<32xf32>
    %36 = vector.shape_cast %35 : vector<32xf32> to vector<1x32xf32>
    %37 = arith.addf %34, %36 : vector<1x32xf32>
    %c0_14 = arith.constant 0 : index
    %c0_15 = arith.constant 0 : index
    %38 = vector.load %arg7[%c0_14, %c0_15] : memref<1x32xf32, #tpu.memory_space<vmem>>, vector<1x32xf32>
    tpu.vector_store %arg7[%c0_14, %c0_15], %37 {strides = array<i32>} : memref<1x32xf32, #tpu.memory_space<vmem>>, vector<1x32xf32>,
    %c0_16 = arith.constant 0 : index
    %c0_17 = arith.constant 0 : index
    %39 = vector.load %arg4[%c0_16, %c0_17] : memref<4x32xf32, #tpu.memory_space<vmem>>, vector<4x32xf32>
    %cst_18 = arith.constant 0.000000e+00 : f32
    %40 = vector.shape_cast %14 : vector<1x32xi1> to vector<1x32xi1>
    %41 = vector.broadcast %40 : vector<1x32xi1> to vector<4x32xi1>
    %42 = vector.broadcast %cst_18 : f32 to vector<4x32xf32>
    %43 = arith.select %41, %39, %42 : vector<4x32xi1>, vector<4x32xf32>
    %44 = tpu.iota {dimensions = array<i32: 0>} : vector<4x32xi32>
    %c1_i32_19 = arith.constant 1 : i32
    %45 = vector.broadcast %c1_i32_19 : i32 to vector<4x32xi32>
    %46 = arith.addi %44, %45 : vector<4x32xi32>
    %47 = vector.broadcast %11 : vector<1x32xi32> to vector<4x32xi32>
    %48 = arith.cmpi eq, %46, %47 : vector<4x32xi32>
    %cst_20 = arith.constant 0.000000e+00 : f32
    %49 = vector.broadcast %cst_20 : f32 to vector<4x32xf32>
    %50 = arith.subf %49, %43 : vector<4x32xf32>
    %51 = arith.select %48, %43, %50 : vector<4x32xi1>, vector<4x32xf32>
    %52 = math.absf %51 : vector<4x32xf32>
    %cst_21 = arith.constant 0.000000e+00 : f32
    %53 = vector.broadcast %cst_21 : f32 to vector<4x32xf32>
    %54 = arith.subf %53, %52 : vector<4x32xf32>
    %55 = math.exp %54 : vector<4x32xf32>
    %cst_22 = arith.constant 0.000000e+00 : f32
    %56 = vector.broadcast %cst_22 : f32 to vector<4x32xf32>
    %57 = arith.subf %56, %51 : vector<4x32xf32>
    %cst_23 = arith.constant 0.000000e+00 : f32
    %58 = vector.broadcast %cst_23 : f32 to vector<4x32xf32>
    %59 = arith.maximumf %57, %58 : vector<4x32xf32>
    %cst_24 = arith.constant 1.000000e+00 : f32
    %60 = vector.broadcast %cst_24 : f32 to vector<4x32xf32>
    %61 = arith.addf %60, %55 : vector<4x32xf32>
    %62 = math.log %61 : vector<4x32xf32>
    %63 = arith.addf %59, %62 : vector<4x32xf32>
    %cst_25 = arith.constant 0.000000e+00 : f32
    %64 = vector.broadcast %cst_25 : f32 to vector<4x32xf32>
    %65 = arith.cmpf oge, %51, %64 : vector<4x32xf32>
    %cst_26 = arith.constant 1.000000e+00 : f32
    %66 = vector.broadcast %cst_26 : f32 to vector<4x32xf32>
    %67 = arith.select %65, %55, %66 : vector<4x32xi1>, vector<4x32xf32>
    %cst_27 = arith.constant 1.000000e+00 : f32
    %68 = vector.broadcast %cst_27 : f32 to vector<4x32xf32>
    %69 = arith.addf %68, %55 : vector<4x32xf32>
    %70 = arith.divf %67, %69 : vector<4x32xf32>
    %71 = arith.mulf %70, %70 : vector<4x32xf32>
    %72 = arith.mulf %63, %71 : vector<4x32xf32>
    %cst_28 = arith.constant 2.500000e-01 : f32
    %cst_29 = arith.constant 7.500000e-01 : f32
    %73 = vector.broadcast %cst_28 : f32 to vector<4x32xf32>
    %74 = vector.broadcast %cst_29 : f32 to vector<4x32xf32>
    %75 = arith.select %48, %73, %74 : vector<4x32xi1>, vector<4x32xf32>
    %76 = arith.mulf %75, %72 : vector<4x32xf32>
    %cst_30 = arith.constant 0.000000e+00 : f32
    %77 = vector.shape_cast %14 : vector<1x32xi1> to vector<1x32xi1>
    %78 = vector.broadcast %77 : vector<1x32xi1> to vector<4x32xi1>
    %79 = vector.broadcast %cst_30 : f32 to vector<4x32xf32>
    %80 = arith.select %78, %76, %79 : vector<4x32xi1>, vector<4x32xf32>
    %c0_31 = arith.constant 0 : index
    %c0_32 = arith.constant 0 : index
    %81 = vector.load %arg8[%c0_31, %c0_32] : memref<1x32xf32, #tpu.memory_space<vmem>>, vector<1x32xf32>
    %cst_33 = arith.constant dense<0.000000e+00> : vector<32xf32>
    %82 = vector.multi_reduction <add>, %80, %cst_33 [0] : vector<4x32xf32> to vector<32xf32>
    %83 = vector.shape_cast %82 : vector<32xf32> to vector<1x32xf32>
    %84 = arith.addf %81, %83 : vector<1x32xf32>
    %c0_34 = arith.constant 0 : index
    %c0_35 = arith.constant 0 : index
    %85 = vector.load %arg8[%c0_34, %c0_35] : memref<1x32xf32, #tpu.memory_space<vmem>>, vector<1x32xf32>
    tpu.vector_store %arg8[%c0_34, %c0_35], %84 {strides = array<i32>} : memref<1x32xf32, #tpu.memory_space<vmem>>, vector<1x32xf32>,
    %c0_36 = arith.constant 0 : index
    %c0_37 = arith.constant 0 : index
    %86 = vector.load %arg9[%c0_36, %c0_37] : memref<1x32xf32, #tpu.memory_space<vmem>>, vector<1x32xf32>
    %87 = arith.extui %17 : vector<1x32xi1> to vector<1x32xi32>
    %88 = arith.sitofp %87 : vector<1x32xi32> to vector<1x32xf32>
    %89 = arith.addf %86, %88 : vector<1x32xf32>
    %c0_38 = arith.constant 0 : index
    %c0_39 = arith.constant 0 : index
    %90 = vector.load %arg9[%c0_38, %c0_39] : memref<1x32xf32, #tpu.memory_space<vmem>>, vector<1x32xf32>
    tpu.vector_store %arg9[%c0_38, %c0_39], %89 {strides = array<i32>} : memref<1x32xf32, #tpu.memory_space<vmem>>, vector<1x32xf32>,
    %c0_i32_40 = arith.constant 0 : i32
    %91 = arith.cmpi eq, %arg1, %c0_i32_40 : i32
    %92 = arith.extui %91 : i1 to i32
    %c0_i32_41 = arith.constant 0 : i32
    %93 = arith.cmpi ne, %92, %c0_i32_41 : i32
    scf.if %93 {
      %c0_42 = arith.constant 0 : index
      %c0_43 = arith.constant 0 : index
      %94 = vector.load %arg7[%c0_42, %c0_43] : memref<1x32xf32, #tpu.memory_space<vmem>>, vector<1x32xf32>
      %95 = vector.shape_cast %94 : vector<1x32xf32> to vector<1x1x32xf32>
      %cst_44 = arith.constant dense<0.000000e+00> : vector<1xf32>
      %96 = vector.multi_reduction <add>, %95, %cst_44 [1, 2] : vector<1x1x32xf32> to vector<1xf32>
      %97 = vector.shape_cast %96 : vector<1xf32> to vector<1x1x1xf32>
      %98 = vector.extract %97[0, 0, 0] : f32 from vector<1x1x1xf32>
      %c0_45 = arith.constant 0 : index
      %c0_46 = arith.constant 0 : index
      %99 = vector.load %arg8[%c0_45, %c0_46] : memref<1x32xf32, #tpu.memory_space<vmem>>, vector<1x32xf32>
      %100 = vector.shape_cast %99 : vector<1x32xf32> to vector<1x1x32xf32>
      %cst_47 = arith.constant dense<0.000000e+00> : vector<1xf32>
      %101 = vector.multi_reduction <add>, %100, %cst_47 [1, 2] : vector<1x1x32xf32> to vector<1xf32>
      %102 = vector.shape_cast %101 : vector<1xf32> to vector<1x1x1xf32>
      %103 = vector.extract %102[0, 0, 0] : f32 from vector<1x1x1xf32>
      %c0_48 = arith.constant 0 : index
      %c0_49 = arith.constant 0 : index
      %104 = vector.load %arg9[%c0_48, %c0_49] : memref<1x32xf32, #tpu.memory_space<vmem>>, vector<1x32xf32>
      %105 = vector.shape_cast %104 : vector<1x32xf32> to vector<1x1x32xf32>
      %cst_50 = arith.constant dense<0.000000e+00> : vector<1xf32>
      %106 = vector.multi_reduction <add>, %105, %cst_50 [1, 2] : vector<1x1x32xf32> to vector<1xf32>
      %107 = vector.shape_cast %106 : vector<1xf32> to vector<1x1x1xf32>
      %108 = vector.extract %107[0, 0, 0] : f32 from vector<1x1x1xf32>
      %109 = tpu.iota {dimensions = array<i32: 1>} : vector<1x128xi32>
      %c0_i32_51 = arith.constant 0 : i32
      %110 = vector.broadcast %c0_i32_51 : i32 to vector<1x128xi32>
      %111 = arith.cmpi eq, %109, %110 : vector<1x128xi32>
      %cst_52 = arith.constant 0.000000e+00 : f32
      %112 = vector.broadcast %98 : f32 to vector<1x128xf32>
      %113 = vector.broadcast %cst_52 : f32 to vector<1x128xf32>
      %114 = arith.select %111, %112, %113 : vector<1x128xi1>, vector<1x128xf32>
      %c1_i32_53 = arith.constant 1 : i32
      %115 = vector.broadcast %c1_i32_53 : i32 to vector<1x128xi32>
      %116 = arith.cmpi eq, %109, %115 : vector<1x128xi32>
      %cst_54 = arith.constant 0.000000e+00 : f32
      %117 = vector.broadcast %103 : f32 to vector<1x128xf32>
      %118 = vector.broadcast %cst_54 : f32 to vector<1x128xf32>
      %119 = arith.select %116, %117, %118 : vector<1x128xi1>, vector<1x128xf32>
      %120 = arith.addf %114, %119 : vector<1x128xf32>
      %c2_i32 = arith.constant 2 : i32
      %121 = vector.broadcast %c2_i32 : i32 to vector<1x128xi32>
      %122 = arith.cmpi eq, %109, %121 : vector<1x128xi32>
      %cst_55 = arith.constant 0.000000e+00 : f32
      %123 = vector.broadcast %108 : f32 to vector<1x128xf32>
      %124 = vector.broadcast %cst_55 : f32 to vector<1x128xf32>
      %125 = arith.select %122, %123, %124 : vector<1x128xi1>, vector<1x128xf32>
      %126 = arith.addf %120, %125 : vector<1x128xf32>
      %c0_56 = arith.constant 0 : index
      %c0_57 = arith.constant 0 : index
      %c0_58 = arith.constant 0 : index
      %127 = vector.load %arg6[%c0_56, %c0_57, %c0_58] : memref<1x1x128xf32, #tpu.memory_space<vmem>>, vector<1x1x128xf32>
      %128 = vector.shape_cast %127 : vector<1x1x128xf32> to vector<1x128xf32>
      %129 = vector.shape_cast %126 : vector<1x128xf32> to vector<1x1x128xf32>
      tpu.vector_store %arg6[%c0_56, %c0_57, %c0_58], %129 {strides = array<i32>} : memref<1x1x128xf32, #tpu.memory_space<vmem>>, vector<1x1x128xf32>,
    } else {
    }
    return
  }
  func.func @transform_0(%arg0: i32, %arg1: i32) -> (i32, i32) {
    %c1_i32 = arith.constant 1 : i32
    %0 = arith.muli %arg0, %c1_i32 : i32
    %1 = arith.addi %0, %arg1 : i32
    %c0_i32 = arith.constant 0 : i32
    %2 = arith.minsi %1, %c0_i32 : i32
    %c0_i32_0 = arith.constant 0 : i32
    %c0_i32_1 = arith.constant 0 : i32
    return %c0_i32_0, %2 : i32, i32
  }
  func.func @transform_1(%arg0: i32, %arg1: i32) -> (i32, i32) {
    %c1_i32 = arith.constant 1 : i32
    %0 = arith.muli %arg0, %c1_i32 : i32
    %1 = arith.addi %0, %arg1 : i32
    %c0_i32 = arith.constant 0 : i32
    %2 = arith.minsi %1, %c0_i32 : i32
    %c0_i32_0 = arith.constant 0 : i32
    %c0_i32_1 = arith.constant 0 : i32
    return %c0_i32_0, %2 : i32, i32
  }
  func.func @transform_2(%arg0: i32, %arg1: i32) -> (i32, i32) {
    %c1_i32 = arith.constant 1 : i32
    %0 = arith.muli %arg0, %c1_i32 : i32
    %1 = arith.addi %0, %arg1 : i32
    %c0_i32 = arith.constant 0 : i32
    %2 = arith.minsi %1, %c0_i32 : i32
    %c0_i32_0 = arith.constant 0 : i32
    %c0_i32_1 = arith.constant 0 : i32
    return %c0_i32_0, %2 : i32, i32
  }
  func.func @transform_3(%arg0: i32, %arg1: i32) -> (i32, i32) {
    %c1_i32 = arith.constant 1 : i32
    %0 = arith.muli %arg0, %c1_i32 : i32
    %1 = arith.addi %0, %arg1 : i32
    %c0_i32 = arith.constant 0 : i32
    %2 = arith.minsi %1, %c0_i32 : i32
    %c0_i32_0 = arith.constant 0 : i32
    %c0_i32_1 = arith.constant 0 : i32
    return %c0_i32_0, %2 : i32, i32
  }
  func.func @transform_4(%arg0: i32, %arg1: i32) -> (i32, i32, i32) {
    %c0_i32 = arith.constant 0 : i32
    %c0_i32_0 = arith.constant 0 : i32
    %c0_i32_1 = arith.constant 0 : i32
    return %arg0, %c0_i32, %c0_i32_0 : i32, i32, i32
  }
}

</mosaic_0001>

<llo_original>
// kernel: tpu_custom_call.1
$region0: #{tpu_custom_call.1}
  #allocation0 [shape = 'u32[]', space=smem, size = 0x4, offset = 0x4, fixed_abs, tag = 'smem constant byte address 0x4 - core index']
  #allocation1 [shape = 'u32[72,128]{1,0:T(1,128)}', space=vmem, size = 0x9000, scoped, tag = 'internal scratch']
  #allocation2 [shape = 'f32[1,32]{1,0:T(1,128)}', space=vmem, size = 0x200, scoped, tag = 'scratch operand']
  #allocation3 [shape = 'f32[1,32]{1,0:T(1,128)}', space=vmem, size = 0x200, scoped, tag = 'scratch operand']
  #allocation4 [shape = 'f32[1,32]{1,0:T(1,128)}', space=vmem, size = 0x200, scoped, tag = 'scratch operand']
  %s0 = inlined_call_operand.hbm [shape: f32[4,32], index: 0, kind: input, shape index: {}]
  %s1 = inlined_call_operand.hbm [shape: f32[4,32], index: 1, kind: input, shape index: {}]
  %s2 = inlined_call_operand.hbm [shape: f32[4,32], index: 2, kind: input, shape index: {}]
  %s3 = inlined_call_operand.vmem [shape: s32[1,32], index: 3, kind: input, shape index: {}]
  %s4 = inlined_call_operand.hbm [shape: f32[1,1,128], index: 4, kind: output, shape index: {}]
  %s5 = sld [smem:[#allocation0]]
  $region46: #{tpu_custom_call.1} parent=0
    _
  %s7 = ssub.s32 1, %s5
  %s8 = scalar_select 0, %s7, %s5
  $region1: #{tpu_custom_call.1} parent=0
    #allocation5 [shape = 'u8[2048]{0}', space=vmem, size = 0x800, scoped, tag = 'input window, operand 0, single buffered']
    #allocation6 [shape = 's32[1]{0}', space=sflag, size = 0x4, scoped, tag = 'scoped memory for tpu_custom_call.1']
    #allocation7 [shape = 's32[1]{0}', space=sflag, size = 0x4, scoped, tag = 'scoped memory for tpu_custom_call.1']
    #allocation8 [shape = 'u8[2048]{0}', space=vmem, size = 0x800, scoped, tag = 'input window, operand 1, single buffered']
    #allocation9 [shape = 's32[1]{0}', space=sflag, size = 0x4, scoped, tag = 'scoped memory for tpu_custom_call.1']
    #allocation10 [shape = 'u8[2048]{0}', space=vmem, size = 0x800, scoped, tag = 'input window, operand 2, single buffered']
    #allocation11 [shape = 'u8[512]{0}', space=vmem, size = 0x400, scoped, tag = 'output window, operand 0, single buffered']
    %9 = vsyncpa [#allocation6], 0
    %10 = vsyncpa [#allocation9], 0
    %11 = vsyncpa [#allocation7], 0
    // Predicated region
    $region2: #{tpu_custom_call.1} parent=1 // pred_check
      _
    $region3: #{tpu_custom_call.1} parent=1 // pred_check_branch
      %13 = sbr.rel (0) target = $region5
    $region4: #{tpu_custom_call.1} parent=1 // pred_region
      %s14 = sadd.s32 0, 0
      %p15 = scmp.lt.s32.totalorder %s14, 0
      %s16 = scalar_select %p15, %s14, 0
      %18 = vsyncadd [#allocation6], 0
      %s19 = smul.addr %s16, 4
      %s20 = scalar_lea.hbm %s0, %s19
      %s22 = sshll.u32 %s20, 4
      %s23 = int_to_ptr.hbm [resolvable:$true] %s22
      %s24 = sshll.u32 [#allocation5], 4
      %s25 = int_to_ptr.vmem [resolvable:$true] %s24
      %27 = dma.hbm_to_vmem [thread:$0]  %s23, 64, %s25, [#allocation6]
    $region5: #{tpu_custom_call.1} parent=1 // pred_fallthru
      _
    // Predicated region
    $region6: #{tpu_custom_call.1} parent=1 // pred_check
      _
    $region7: #{tpu_custom_call.1} parent=1 // pred_check_branch
      %29 = sbr.rel (0) target = $region9
    $region8: #{tpu_custom_call.1} parent=1 // pred_region
      %s30 = sadd.s32 0, 0
      %p31 = scmp.lt.s32.totalorder %s30, 0
      %s32 = scalar_select %p31, %s30, 0
      %34 = vsyncadd [#allocation9], 0
      %s35 = smul.addr %s32, 4
      %s36 = scalar_lea.hbm %s1, %s35
      %s38 = sshll.u32 %s36, 4
      %s39 = int_to_ptr.hbm [resolvable:$true] %s38
      %s40 = sshll.u32 [#allocation8], 4
      %s41 = int_to_ptr.vmem [resolvable:$true] %s40
      %43 = dma.hbm_to_vmem [thread:$0]  %s39, 64, %s41, [#allocation9]
    $region9: #{tpu_custom_call.1} parent=1 // pred_fallthru
      _
    // Predicated region
    $region10: #{tpu_custom_call.1} parent=1 // pred_check
      _
    $region11: #{tpu_custom_call.1} parent=1 // pred_check_branch
      %45 = sbr.rel (0) target = $region13
    $region12: #{tpu_custom_call.1} parent=1 // pred_region
      %s46 = sadd.s32 0, 0
      %p47 = scmp.lt.s32.totalorder %s46, 0
      %s48 = scalar_select %p47, %s46, 0
      %50 = vsyncadd [#allocation9], 0
      %s51 = smul.addr %s48, 4
      %s52 = scalar_lea.hbm %s2, %s51
      %s54 = sshll.u32 %s52, 4
      %s55 = int_to_ptr.hbm [resolvable:$true] %s54
      %s56 = sshll.u32 [#allocation10], 4
      %s57 = int_to_ptr.vmem [resolvable:$true] %s56
      %59 = dma.hbm_to_vmem [thread:$0]  %s55, 64, %s57, [#allocation9]
    $region13: #{tpu_custom_call.1} parent=1 // pred_fallthru
      _
    // Predicated region
    $region14: #{tpu_custom_call.1} parent=1 // pred_check
      _
    $region15: #{tpu_custom_call.1} parent=1 // pred_check_branch
      %61 = sbr.rel (0) target = $region17
    $region16: #{tpu_custom_call.1} parent=1 // pred_region
      %s62 = sadd.s32 0, 0
      %p63 = scmp.lt.s32.totalorder %s62, 0
      %s64 = scalar_select %p63, %s62, 0
      %p65 = scmp.lt.s32.totalorder %s64, 0
      %s66 = scalar_select %p65, %s64, 0
      %s67 = scalar_lea.vmem %s3, %s66
      %s68 = sadd.s32 0, 0
      %p69 = scmp.lt.s32.totalorder %s68, 0
      %s70 = scalar_select %p69, %s68, 0
    $region17: #{tpu_custom_call.1} parent=1 // pred_fallthru
      _
    // Predicated region
    $region18: #{tpu_custom_call.1} parent=1 // pred_check
      _
    $region19: #{tpu_custom_call.1} parent=1 // pred_check_branch
      %72 = sbr.rel (0) target = $region21
    $region20: #{tpu_custom_call.1} parent=1 // pred_region
      %74 = dma.done [#allocation6], 64
    $region21: #{tpu_custom_call.1} parent=1 // pred_fallthru
      _
    // Predicated region
    $region22: #{tpu_custom_call.1} parent=1 // pred_check
      _
    $region23: #{tpu_custom_call.1} parent=1 // pred_check_branch
      %76 = sbr.rel (0) target = $region25
    $region24: #{tpu_custom_call.1} parent=1 // pred_region
      %78 = dma.done [#allocation9], 64
    $region25: #{tpu_custom_call.1} parent=1 // pred_fallthru
      _
    // Predicated region
    $region26: #{tpu_custom_call.1} parent=1 // pred_check
      _
    $region27: #{tpu_custom_call.1} parent=1 // pred_check_branch
      %80 = sbr.rel (0) target = $region29
    $region28: #{tpu_custom_call.1} parent=1 // pred_region
      %82 = dma.done [#allocation9], 64
    $region29: #{tpu_custom_call.1} parent=1 // pred_fallthru
      _
    %s83 = sadd.s32 0, 0
    %p84 = scmp.lt.s32.totalorder %s83, 0
    %s85 = scalar_select %p84, %s83, 0
    %p86 = scmp.lt.s32.totalorder %s85, 0
    %s87 = scalar_select %p86, %s85, 0
    %s88 = scalar_lea.vmem %s3, %s87
    %s89 = sadd.s32 0, 0
    %p90 = scmp.lt.s32.totalorder %s89, 0
    %s91 = scalar_select %p90, %s89, 0
    %s92 = sadd.s32 0, 0
    %p93 = scmp.lt.s32.totalorder %s92, 0
    %s94 = scalar_select %p93, %s92, 0
    %s95 = sadd.s32 0, 0
    %p96 = scmp.lt.s32.totalorder %s95, 0
    %s97 = scalar_select %p96, %s95, 0
    %s98 = sadd.s32 0, 0
    %p99 = scmp.lt.s32.totalorder %s98, 0
    %s100 = scalar_select %p99, %s98, 0
    %p101 = scmp.lt.s32.totalorder %s100, 0
    %s102 = scalar_select %p101, %s100, 0
    %s103 = scalar_lea.vmem %s3, %s102
    %s104 = sadd.s32 0, 0
    %p105 = scmp.lt.s32.totalorder %s104, 0
    %s106 = scalar_select %p105, %s104, 0
    %p107 = scmp.eq.s32.totalorder 0, 0
    // Predicated region
    $region30: #{tpu_custom_call.1} parent=1 // pred_check
      %p108 = pneg %p107
    $region31: #{tpu_custom_call.1} parent=1 // pred_check_branch
      %110 = sbr.rel (%p108) target = $region33
    $region32: #{tpu_custom_call.1} parent=1 // pred_region
      %vm111 = vcmask 253952
      %112 = vst.msk [vmem:[#allocation2] sm:$0x1] %vm111, 0.0
      %113 = vst.msk [vmem:[#allocation3] sm:$0x1] %vm111, 0.0
      %114 = vst.msk [vmem:[#allocation4] sm:$0x1] %vm111, 0.0
    $region33: #{tpu_custom_call.1} parent=1 // pred_fallthru
      _
    %s115 = sadd.s32 0, 0
    %s116 = smul.u32 %s115, 32
    %v117 = vlaneseq
    %v118 = vand.u32 %v117, 127
    %v119 = vstv %s116
    %v120 = vadd.s32 %v118, %v119
    %vm121 = vcmp.lt.s32.totalorder %v120, 32
    %v122 = vld [vmem:[%s103] sm:$0x1]
    %vm123 = vcmp.gt.s32.totalorder %v122, 4294967295
    %vm124 = vmand %vm121, %vm123
    %vm125 = vcmp.gt.s32.totalorder %v122, 0
    %vm126 = vmand %vm121, %vm125
    %v127 = vld [vmem:[#allocation5] sm:$0xf]
    %v128 = vld [vmem:[#allocation8] sm:$0xf]
    %v129 = vsub.f32 %v127, %v128
    %v130 = vand.u32 2147483647, %v129
    %vm131 = vcmp.lt.f32.partialorder %v130, 1.0
    %v132 = vmul.f32 %v130, 0.5
    %v133 = vmul.f32 %v132, %v130
    %v134 = vsub.f32 %v130, 0.5
    %v135 = vsel %vm131, %v133, %v134
    %v136 = vsel %vm126, 1, 0
    %v137 = vperm.slane %v136, 0
    %vm138 = vcmp.eq.s32.totalorder %v137, 1
    %v139 = vsel %vm138, %v135, 0.0
    %v140 = vld [vmem:[#allocation2] sm:$0x1]
    %vm141 = vcmask 257024
    %v142 = vsel %vm141, %v139, 0.0
    %v143 = vrot.slane %v142, 4
    %v144 = vadd.f32 %v142, %v143
    %v145 = vrot.slane %v144, 2
    %v146 = vadd.f32 %v144, %v145
    %v147 = vrot.slane %v146, 1
    %v148 = vadd.f32 %v146, %v147
    %v149 = vadd.f32 %v140, %v148
    %vm150 = vcmask 253952
    %151 = vst.msk [vmem:[#allocation2] sm:$0x1] %vm150, %v149
    %v152 = vld [vmem:[#allocation10] sm:$0xf]
    %v153 = vsel %vm124, 1, 0
    %v154 = vperm.slane %v153, 0
    %vm155 = vcmp.eq.s32.totalorder %v154, 1
    %v156 = vsel %vm155, %v152, 0.0
    %v157 = vlaneseq
    %v158 = vshrl.u32 %v157, 7
    %v159 = vadd.s32 %v158, 1
    %v160 = vperm.slane %v122, 0
    %vm161 = vcmp.eq.s32.totalorder %v159, %v160
    %v162 = vsub.f32 0.0, %v156
    %v163 = vsel %vm161, %v156, %v162
    %v164 = vand.u32 2147483647, %v163
    %v165 = vsub.f32 0.0, %v164
    %v166 = vmul.f32 %v165, 1.442695
    %v167 = vpow.pop %v166
    %v168 = vsub.f32 0.0, %v163
    %v169 = vmax.f32 %v168, 0.0
    %v170 = vadd.f32 %v167, 1.0
    %v171 = vlog2.pop %v170
    %v172 = vmul.f32 %v171, 0.6931472
    %v173 = vadd.f32 %v169, %v172
    %vm174 = vcmp.ge.f32.partialorder %v163, 0.0
    %v175 = vsel %vm174, %v167, 1.0
    %v176 = vrcp.pop %v170
    %v177 = vmul.f32 %v170, %v176
    %v178 = vsub.f32 1.0, %v177
    %v179 = vmul.f32 %v176, %v178
    %v180 = vadd.f32 %v176, %v179
    %vm181 = vweird.f32 %v170
    %vm182 = vweird.f32 %v176
    %vm183 = vmor %vm181, %vm182
    %v184 = vsel %vm183, %v176, %v180
    %v185 = vand.u32 2147483647, %v170
    %vm186 = vcmp.eq.f32.partialorder %v185, 8.507059e+37
    %v187 = vand.u32 %v170, 2147483648
    %v188 = vor.u32 1.1754944e-38, %v187
    %v189 = vsel %vm186, %v188, %v184
    %v190 = vmul.f32 %v175, %v189
    %v191 = vmul.f32 %v190, %v190
    %v192 = vmul.f32 %v173, %v191
    %v193 = vsel %vm161, 0.25, 0.75
    %v194 = vmul.f32 %v193, %v192
    %v195 = vsel %vm155, %v194, 0.0
    %v196 = vld [vmem:[#allocation3] sm:$0x1]
    %v197 = vsel %vm141, %v195, 0.0
    %v198 = vrot.slane %v197, 4
    %v199 = vadd.f32 %v197, %v198
    %v200 = vrot.slane %v199, 2
    %v201 = vadd.f32 %v199, %v200
    %v202 = vrot.slane %v201, 1
    %v203 = vadd.f32 %v201, %v202
    %v204 = vadd.f32 %v196, %v203
    %205 = vst.msk [vmem:[#allocation3] sm:$0x1] %vm150, %v204
    %v206 = vld [vmem:[#allocation4] sm:$0x1]
    %v207 = vcvt.s32.f32 %v136
    %v208 = vadd.f32 %v206, %v207
    %209 = vst.msk [vmem:[#allocation4] sm:$0x1] %vm150, %v208
    // Predicated region
    $region34: #{tpu_custom_call.1} parent=1 // pred_check
      %p210 = pneg %p107
    $region35: #{tpu_custom_call.1} parent=1 // pred_check_branch
      %212 = sbr.rel (%p210) target = $region37
    $region36: #{tpu_custom_call.1} parent=1 // pred_region
      %v213 = vld [vmem:[#allocation2] sm:$0x1]
      %v214 = vsel %vm150, %v213, 0.0
      %215 = vadd.xlane.f32.xlu0 %v214
      %v216 = vpop.xlane.xlu0 %215
      %v217 = vrot.slane %v216, 4
      %v218 = vadd.f32 %v216, %v217
      %v219 = vrot.slane %v218, 2
      %v220 = vadd.f32 %v218, %v219
      %v221 = vrot.slane %v220, 1
      %v222 = vadd.f32 %v220, %v221
      %s223 = vtos %v222
      %v224 = vld [vmem:[#allocation3] sm:$0x1]
      %v225 = vsel %vm150, %v224, 0.0
      %226 = vadd.xlane.f32.xlu0 %v225
      %v227 = vpop.xlane.xlu0 %226
      %v228 = vrot.slane %v227, 4
      %v229 = vadd.f32 %v227, %v228
      %v230 = vrot.slane %v229, 2
      %v231 = vadd.f32 %v229, %v230
      %v232 = vrot.slane %v231, 1
      %v233 = vadd.f32 %v231, %v232
      %s234 = vtos %v233
      %v235 = vld [vmem:[#allocation4] sm:$0x1]
      %v236 = vsel %vm150, %v235, 0.0
      %237 = vadd.xlane.f32.xlu0 %v236
      %v238 = vpop.xlane.xlu0 %237
      %v239 = vrot.slane %v238, 4
      %v240 = vadd.f32 %v238, %v239
      %v241 = vrot.slane %v240, 2
      %v242 = vadd.f32 %v240, %v241
      %v243 = vrot.slane %v242, 1
      %v244 = vadd.f32 %v242, %v243
      %s245 = vtos %v244
      %vm246 = vcmp.eq.s32.totalorder %v118, 0
      %v247 = vstv %s223
      %v248 = vsel %vm246, %v247, 0.0
      %vm249 = vcmp.eq.s32.totalorder %v118, 1
      %v250 = vstv %s234
      %v251 = vsel %vm249, %v250, 0.0
      %v252 = vadd.f32 %v248, %v251
      %vm253 = vcmp.eq.s32.totalorder %v118, 2
      %v254 = vstv %s245
      %v255 = vsel %vm253, %v254, 0.0
      %v256 = vadd.f32 %v252, %v255
      %257 = vst [vmem:[#allocation11] sm:$0x1] %v256
    $region37: #{tpu_custom_call.1} parent=1 // pred_fallthru
      _
    // Predicated region
    $region38: #{tpu_custom_call.1} parent=1 // pred_check
      _
    $region39: #{tpu_custom_call.1} parent=1 // pred_check_branch
      %259 = sbr.rel (0) target = $region41
    $region40: #{tpu_custom_call.1} parent=1 // pred_region
      %261 = vsyncadd [#allocation7], 0
      %s263 = sshll.u32 [#allocation11], 4
      %s264 = int_to_ptr.vmem [resolvable:$true] %s263
      %s265 = sshll.u32 %s4, 4
      %s266 = int_to_ptr.hbm [resolvable:$true] %s265
      %268 = dma.vmem_to_hbm [thread:$0]  %s264, 16, %s266, [#allocation7]
    $region41: #{tpu_custom_call.1} parent=1 // pred_fallthru
      _
    // Predicated region
    $region42: #{tpu_custom_call.1} parent=1 // pred_check
      _
    $region43: #{tpu_custom_call.1} parent=1 // pred_check_branch
      %270 = sbr.rel (0) target = $region45
    $region44: #{tpu_custom_call.1} parent=1 // pred_region
      %272 = dma.done [#allocation7], 16
    $region45: #{tpu_custom_call.1} parent=1 // pred_fallthru
      _
    %273 = vsyncpa [#allocation6], 1
    %274 = vsyncpa [#allocation9], 1
    %275 = vsyncpa [#allocation7], 1

</llo_original>
